<compile_context>
chip_gen: v6e
topology: v6e:2x2x1
jax: 0.10.0
libtpu: 0.0.40
codegen_flags: <defaults>
</compile_context>

<pallas_src>
import math
import jax
import jax.numpy as jnp
from jax import lax
from jax.experimental import pallas as pl
from jax.experimental.pallas import tpu as pltpu

LN_EPS = 1e-5                      # PyTorch nn.LayerNorm default
INV_SQRT2 = 1.0 / math.sqrt(2.0)


def _ff_kernel(x_ref, g_ref, b_ref, w1_ref, b1_ref, w2_ref, b2_ref, o_ref):
    # x tile: (tm, dim) f32. Weights: bf16. All math accumulates in f32.
    x = x_ref[...].astype(jnp.float32)

    # --- LayerNorm over last dim (biased variance, eps=1e-5, like torch) ---
    mean = jnp.mean(x, axis=-1, keepdims=True)
    xc = x - mean
    var = jnp.mean(xc * xc, axis=-1, keepdims=True)
    xn = xc * lax.rsqrt(var + LN_EPS)
    xn = xn * g_ref[...] + b_ref[...]                    # broadcast (1, dim)

    # --- Linear(dim -> hidden): bf16 operands, f32 accumulation on the MXU ---
    h = jnp.dot(xn.astype(jnp.bfloat16), w1_ref[...],
                preferred_element_type=jnp.float32)
    h = h + b1_ref[...]                                  # (tm, hidden) f32

    # --- GELU (exact, erf-based: matches PyTorch nn.GELU default) ---
    h = 0.5 * h * (1.0 + lax.erf(h * INV_SQRT2))

    # --- Linear(hidden -> dim): bf16 operands, f32 accumulation ---
    out = jnp.dot(h.astype(jnp.bfloat16), w2_ref[...],
                  preferred_element_type=jnp.float32)
    out = out + b2_ref[...]                              # (tm, dim)

    o_ref[...] = out.astype(o_ref.dtype)


def _choose_tm(n_rows, tm_max=256):
    """Row tile: multiple of 8, capped at tm_max, keeps >=2 grid steps when possible."""
    if n_rows >= 2 * tm_max:
        return tm_max
    half = max(8, (n_rows // 2) // 8 * 8)
    return min(tm_max, half)


def feed_forward(x, gamma, beta, w1, b1, w2, b2, *, tm=None):
    """x: (B, S, dim) float32. Linear weights stored as (in, out) so kernel does x @ W."""
    B, S, dim = x.shape
    hidden = w1.shape[1]
    N = B * S

    if tm is None:
        tm = _choose_tm(N)
    tm = max(8, (tm // 8) * 8)

    n_blocks = pl.cdiv(N, tm)
    n_pad = n_blocks * tm

    x2 = x.reshape(N, dim)
    if n_pad != N:
        # Zero-pad rows; LN of a zero row is finite (var+eps), padded rows are dropped.
        x2 = jnp.pad(x2, ((0, n_pad - N), (0, 0)))

    # 2-D views so broadcasts live cleanly in VMEM with dim/hidden on lanes.
    g2 = gamma.reshape(1, dim).astype(jnp.float32)
    be2 = beta.reshape(1, dim).astype(jnp.float32)
    b1_2 = b1.reshape(1, hidden).astype(jnp.float32)
    b2_2 = b2.reshape(1, dim).astype(jnp.float32)
    w1_bf = w1.astype(jnp.bfloat16)
    w2_bf = w2.astype(jnp.bfloat16)

    # VMEM budget: 2x double-buffered tiles + resident bf16 weights + f32 intermediate.
    x_tile = tm * dim * 4
    out_tile = tm * dim * 4
    w_bytes = 2 * (dim * hidden + hidden * dim)            # bf16 W1 + W2
    bias_bytes = (2 * dim + hidden + dim) * 4
    h_bytes = tm * hidden * 4
    est = 2 * (x_tile + out_tile + w_bytes + bias_bytes) + 2 * h_bytes + (2 << 20)
    vmem_limit = int(min(max(est, 16 << 20), 64 << 20))    # 64 MiB cap (v7x physical)

    out2 = pl.pallas_call(
        _ff_kernel,
        out_shape=jax.ShapeDtypeStruct((n_pad, dim), x.dtype),
        grid_spec=pltpu.PrefetchScalarGridSpec(
            num_scalar_prefetch=0,
            grid=(n_blocks,),
            in_specs=[
                pl.BlockSpec((tm, dim), lambda i: (i, 0)),       # x rows
                pl.BlockSpec((1, dim), lambda i: (0, 0)),        # gamma   (resident)
                pl.BlockSpec((1, dim), lambda i: (0, 0)),        # beta    (resident)
                pl.BlockSpec((dim, hidden), lambda i: (0, 0)),   # W1 bf16 (resident)
                pl.BlockSpec((1, hidden), lambda i: (0, 0)),     # b1      (resident)
                pl.BlockSpec((hidden, dim), lambda i: (0, 0)),   # W2 bf16 (resident)
                pl.BlockSpec((1, dim), lambda i: (0, 0)),        # b2      (resident)
            ],
            out_specs=pl.BlockSpec((tm, dim), lambda i: (i, 0)),
        ),
        compiler_params=pltpu.CompilerParams(
            dimension_semantics=("parallel",),
            vmem_limit_bytes=vmem_limit),
    )(x2, g2, be2, w1_bf, b1_2, w2_bf, b2_2)

    return out2[:N].reshape(B, S, dim)
    # TODO(synk): for very large hidden dims (ViT-H on v7x), add a hidden-dim
    # reduction grid axis with a VMEM f32 accumulator instead of one resident GEMM.


def _reference(x, gamma, beta, w1, b1, w2, b2):
    mean = jnp.mean(x, axis=-1, keepdims=True)
    var = jnp.mean((x - mean) ** 2, axis=-1, keepdims=True)
    xn = (x - mean) / jnp.sqrt(var + LN_EPS) * gamma + beta
    h = xn @ w1 + b1
    h = 0.5 * h * (1.0 + lax.erf(h * INV_SQRT2))
    return h @ w2 + b2


if __name__ == "__main__":
    B, S, dim, hidden = 2, 8, 32, 64

    key = jax.random.PRNGKey(0)
    kx, kw1, kb1, kw2, kb2 = jax.random.split(key, 5)

    x = jax.random.normal(kx, (B, S, dim), dtype=jnp.float32)

    # Deterministic synthetic parameters (LayerNorm: gamma=1, beta=0 like init).
    gamma = jnp.ones((dim,), jnp.float32)
    beta = jnp.zeros((dim,), jnp.float32)
    # Linear weights stored as (in_features, out_features).
    w1 = jax.random.normal(kw1, (dim, hidden), dtype=jnp.float32) * (1.0 / math.sqrt(dim))
    b1 = jax.random.normal(kb1, (hidden,), dtype=jnp.float32) * 0.01
    w2 = jax.random.normal(kw2, (hidden, dim), dtype=jnp.float32) * (1.0 / math.sqrt(hidden))
    b2 = jax.random.normal(kb2, (dim,), dtype=jnp.float32) * 0.01

    out = feed_forward(x, gamma, beta, w1, b1, w2, b2)
    out = jax.block_until_ready(out)

    ref = _reference(x, gamma, beta, w1, b1, w2, b2)
    assert out.shape == (B, S, dim)
    # bf16 MXU operands with f32 accumulation -> slightly looser tolerance than pure f32.
    assert jnp.allclose(out, ref, atol=2e-2, rtol=2e-2), "kernel mismatch vs reference"

    print("KERNEL_OK")
</pallas_src>

<mosaic_0001>
module attributes {stable_mosaic.version = 11 : i64} {
  func.func @_ff_kernel(%arg0: i32, %arg1: memref<8x32xf32, #tpu.memory_space<vmem>>, %arg2: memref<1x32xf32, #tpu.memory_space<vmem>>, %arg3: memref<1x32xf32, #tpu.memory_space<vmem>>, %arg4: memref<32x64xbf16, #tpu.memory_space<vmem>>, %arg5: memref<1x64xf32, #tpu.memory_space<vmem>>, %arg6: memref<64x32xbf16, #tpu.memory_space<vmem>>, %arg7: memref<1x32xf32, #tpu.memory_space<vmem>>, %arg8: memref<8x32xf32, #tpu.memory_space<vmem>>) attributes {dimension_semantics = [#tpu.dimension_semantics<parallel>], iteration_bounds = array<i64: 2>, scalar_prefetch = 0 : i64, scratch_operands = 0 : i64, tpu.core_type = #tpu.core_type<tc>, window_params = [{transform_indices = @transform_0, window_bounds = array<i64: 8, 32>}, {pipeline_mode = #tpu.pipeline_mode<synchronous>, transform_indices = @transform_1, window_bounds = array<i64: 1, 32>}, {pipeline_mode = #tpu.pipeline_mode<synchronous>, transform_indices = @transform_2, window_bounds = array<i64: 1, 32>}, {pipeline_mode = #tpu.pipeline_mode<synchronous>, transform_indices = @transform_3, window_bounds = array<i64: 32, 64>}, {pipeline_mode = #tpu.pipeline_mode<synchronous>, transform_indices = @transform_4, window_bounds = array<i64: 1, 64>}, {pipeline_mode = #tpu.pipeline_mode<synchronous>, transform_indices = @transform_5, window_bounds = array<i64: 64, 32>}, {pipeline_mode = #tpu.pipeline_mode<synchronous>, transform_indices = @transform_6, window_bounds = array<i64: 1, 32>}, {transform_indices = @transform_7, window_bounds = array<i64: 8, 32>}]} {
    %c0 = arith.constant 0 : index
    %c0_0 = arith.constant 0 : index
    %0 = vector.load %arg1[%c0, %c0_0] : memref<8x32xf32, #tpu.memory_space<vmem>>, vector<8x32xf32>
    %cst = arith.constant dense<0.000000e+00> : vector<8xf32>
    %1 = vector.multi_reduction <add>, %0, %cst [1] : vector<8x32xf32> to vector<8xf32>
    %2 = vector.shape_cast %1 : vector<8xf32> to vector<8x1xf32>
    %cst_1 = arith.constant 3.200000e+01 : f32
    %3 = vector.broadcast %cst_1 : f32 to vector<8x1xf32>
    %4 = arith.divf %2, %3 : vector<8x1xf32>
    %5 = vector.broadcast %4 : vector<8x1xf32> to vector<8x32xf32>
    %6 = arith.subf %0, %5 : vector<8x32xf32>
    %7 = arith.mulf %6, %6 : vector<8x32xf32>
    %cst_2 = arith.constant dense<0.000000e+00> : vector<8xf32>
    %8 = vector.multi_reduction <add>, %7, %cst_2 [1] : vector<8x32xf32> to vector<8xf32>
    %9 = vector.shape_cast %8 : vector<8xf32> to vector<8x1xf32>
    %cst_3 = arith.constant 3.200000e+01 : f32
    %10 = vector.broadcast %cst_3 : f32 to vector<8x1xf32>
    %11 = arith.divf %9, %10 : vector<8x1xf32>
    %cst_4 = arith.constant 9.99999974E-6 : f32
    %12 = vector.broadcast %cst_4 : f32 to vector<8x1xf32>
    %13 = arith.addf %11, %12 : vector<8x1xf32>
    %14 = math.rsqrt %13 : vector<8x1xf32>
    %15 = vector.broadcast %14 : vector<8x1xf32> to vector<8x32xf32>
    %16 = arith.mulf %6, %15 : vector<8x32xf32>
    %c0_5 = arith.constant 0 : index
    %c0_6 = arith.constant 0 : index
    %17 = vector.load %arg2[%c0_5, %c0_6] : memref<1x32xf32, #tpu.memory_space<vmem>>, vector<1x32xf32>
    %18 = vector.broadcast %17 : vector<1x32xf32> to vector<8x32xf32>
    %19 = arith.mulf %16, %18 : vector<8x32xf32>
    %c0_7 = arith.constant 0 : index
    %c0_8 = arith.constant 0 : index
    %20 = vector.load %arg3[%c0_7, %c0_8] : memref<1x32xf32, #tpu.memory_space<vmem>>, vector<1x32xf32>
    %21 = vector.broadcast %20 : vector<1x32xf32> to vector<8x32xf32>
    %22 = arith.addf %19, %21 : vector<8x32xf32>
    %23 = arith.truncf %22 : vector<8x32xf32> to vector<8x32xbf16>
    %c0_9 = arith.constant 0 : index
    %c0_10 = arith.constant 0 : index
    %24 = vector.load %arg4[%c0_9, %c0_10] : memref<32x64xbf16, #tpu.memory_space<vmem>>, vector<32x64xbf16>
    %cst_11 = arith.constant dense<0.000000e+00> : vector<8x64xf32>
    %25 = tpu.matmul %23, %24, %cst_11 {dimension_numbers = #tpu.dot_dimension_numbers<[1], [0], [0], [1], [0, 0, 1, 1], [], []>} : vector<8x32xbf16>, vector<32x64xbf16>, vector<8x64xf32> -> vector<8x64xf32>
    %c0_12 = arith.constant 0 : index
    %c0_13 = arith.constant 0 : index
    %26 = vector.load %arg5[%c0_12, %c0_13] : memref<1x64xf32, #tpu.memory_space<vmem>>, vector<1x64xf32>
    %27 = vector.broadcast %26 : vector<1x64xf32> to vector<8x64xf32>
    %28 = arith.addf %25, %27 : vector<8x64xf32>
    %cst_14 = arith.constant 5.000000e-01 : f32
    %29 = vector.broadcast %cst_14 : f32 to vector<8x64xf32>
    %30 = arith.mulf %29, %28 : vector<8x64xf32>
    %cst_15 = arith.constant 0.707106769 : f32
    %31 = vector.broadcast %cst_15 : f32 to vector<8x64xf32>
    %32 = arith.mulf %28, %31 : vector<8x64xf32>
    %33 = math.erf %32 : vector<8x64xf32>
    %cst_16 = arith.constant 1.000000e+00 : f32
    %34 = vector.broadcast %cst_16 : f32 to vector<8x64xf32>
    %35 = arith.addf %34, %33 : vector<8x64xf32>
    %36 = arith.mulf %30, %35 : vector<8x64xf32>
    %37 = arith.truncf %36 : vector<8x64xf32> to vector<8x64xbf16>
    %c0_17 = arith.constant 0 : index
    %c0_18 = arith.constant 0 : index
    %38 = vector.load %arg6[%c0_17, %c0_18] : memref<64x32xbf16, #tpu.memory_space<vmem>>, vector<64x32xbf16>
    %cst_19 = arith.constant dense<0.000000e+00> : vector<8x32xf32>
    %39 = tpu.matmul %37, %38, %cst_19 {dimension_numbers = #tpu.dot_dimension_numbers<[1], [0], [0], [1], [0, 0, 1, 1], [], []>} : vector<8x64xbf16>, vector<64x32xbf16>, vector<8x32xf32> -> vector<8x32xf32>
    %c0_20 = arith.constant 0 : index
    %c0_21 = arith.constant 0 : index
    %40 = vector.load %arg7[%c0_20, %c0_21] : memref<1x32xf32, #tpu.memory_space<vmem>>, vector<1x32xf32>
    %41 = vector.broadcast %40 : vector<1x32xf32> to vector<8x32xf32>
    %42 = arith.addf %39, %41 : vector<8x32xf32>
    %c0_22 = arith.constant 0 : index
    %c0_23 = arith.constant 0 : index
    %43 = vector.load %arg8[%c0_22, %c0_23] : memref<8x32xf32, #tpu.memory_space<vmem>>, vector<8x32xf32>
    tpu.vector_store %arg8[%c0_22, %c0_23], %42 {strides = array<i32>} : memref<8x32xf32, #tpu.memory_space<vmem>>, vector<8x32xf32>,
    return
  }
  func.func @transform_0(%arg0: i32) -> (i32, i32) {
    %c0_i32 = arith.constant 0 : i32
    %c0_i32_0 = arith.constant 0 : i32
    return %arg0, %c0_i32 : i32, i32
  }
  func.func @transform_1(%arg0: i32) -> (i32, i32) {
    %c0_i32 = arith.constant 0 : i32
    %c0_i32_0 = arith.constant 0 : i32
    %c0_i32_1 = arith.constant 0 : i32
    return %c0_i32, %c0_i32_0 : i32, i32
  }
  func.func @transform_2(%arg0: i32) -> (i32, i32) {
    %c0_i32 = arith.constant 0 : i32
    %c0_i32_0 = arith.constant 0 : i32
    %c0_i32_1 = arith.constant 0 : i32
    return %c0_i32, %c0_i32_0 : i32, i32
  }
  func.func @transform_3(%arg0: i32) -> (i32, i32) {
    %c0_i32 = arith.constant 0 : i32
    %c0_i32_0 = arith.constant 0 : i32
    %c0_i32_1 = arith.constant 0 : i32
    return %c0_i32, %c0_i32_0 : i32, i32
  }
  func.func @transform_4(%arg0: i32) -> (i32, i32) {
    %c0_i32 = arith.constant 0 : i32
    %c0_i32_0 = arith.constant 0 : i32
    %c0_i32_1 = arith.constant 0 : i32
    return %c0_i32, %c0_i32_0 : i32, i32
  }
  func.func @transform_5(%arg0: i32) -> (i32, i32) {
    %c0_i32 = arith.constant 0 : i32
    %c0_i32_0 = arith.constant 0 : i32
    %c0_i32_1 = arith.constant 0 : i32
    return %c0_i32, %c0_i32_0 : i32, i32
  }
  func.func @transform_6(%arg0: i32) -> (i32, i32) {
    %c0_i32 = arith.constant 0 : i32
    %c0_i32_0 = arith.constant 0 : i32
    %c0_i32_1 = arith.constant 0 : i32
    return %c0_i32, %c0_i32_0 : i32, i32
  }
  func.func @transform_7(%arg0: i32) -> (i32, i32) {
    %c0_i32 = arith.constant 0 : i32
    %c0_i32_0 = arith.constant 0 : i32
    return %arg0, %c0_i32 : i32, i32
  }
}

</mosaic_0001>

<llo_original>
// kernel: tpu_custom_call.1
$region0: #{tpu_custom_call.1}
  #allocation0 [shape = 'u32[]', space=smem, size = 0x4, offset = 0x4, fixed_abs, tag = 'smem constant byte address 0x4 - core index']
  #allocation1 [shape = 'u32[144,128]{1,0:T(1,128)}', space=vmem, size = 0x12000, scoped, tag = 'internal scratch']
  %s0 = inlined_call_operand.vmem [shape: f32[16,32], index: 0, kind: input, shape index: {}]
  %s1 = inlined_call_operand.vmem [shape: f32[1,32], index: 1, kind: input, shape index: {}]
  %s2 = inlined_call_operand.vmem [shape: f32[1,32], index: 2, kind: input, shape index: {}]
  %s3 = inlined_call_operand.vmem [shape: bf16[32,64], index: 3, kind: input, shape index: {}]
  %s4 = inlined_call_operand.vmem [shape: f32[1,64], index: 4, kind: input, shape index: {}]
  %s5 = inlined_call_operand.vmem [shape: bf16[64,32], index: 5, kind: input, shape index: {}]
  %s6 = inlined_call_operand.vmem [shape: f32[1,32], index: 6, kind: input, shape index: {}]
  %s7 = inlined_call_operand.hbm [shape: f32[16,32], index: 7, kind: output, shape index: {}]
  %s8 = sld [smem:[#allocation0]]
  $region61: #{tpu_custom_call.1} parent=0
    _
  %s10 = ssub.s32 1, %s8
  %s11 = scalar_select 0, %s10, %s8
  $region1: #{tpu_custom_call.1} parent=0
    #allocation2 [shape = 'u8[8192]{0}', space=vmem, size = 0x2000, scoped, tag = 'output window, operand 0']
    #allocation3 [shape = 's32[2]{0}', space=sflag, size = 0x8, scoped, tag = 'scoped memory for tpu_custom_call.1']
    %12 = vsyncpa [#allocation3], 0
    %s13 = scalar_lea.sflag [#allocation3], 1
    %14 = vsyncpa %s13, 0
    loop: start=0, step=1, limit=4
    $region2: #{tpu_custom_call.1} parent=1 // loop_pre_header
      _
    $region3: #{tpu_custom_call.1} parent=1 // loop_header
      %s16 = sphi 0, %s20
      %p17 = scmp.ge.s32.totalorder %s16, 4
      %s26 = sphi 0, %s28
      %s29 = sphi 0, %s26
      %s30 = sphi 0, %s29
      %s46 = sphi 0, %s30
      %s50 = sphi 0, %s50
      %s52 = sphi 0, %s50
      %s53 = sphi 0, %s52
      %s67 = sphi 0, %s53
      %s71 = sphi 0, %s71
      %s73 = sphi 0, %s71
      %s74 = sphi 0, %s73
      %s88 = sphi 0, %s74
      %s92 = sphi 0, %s92
      %s94 = sphi 0, %s92
      %s95 = sphi 0, %s94
      %s109 = sphi 0, %s95
      %s113 = sphi 0, %s113
      %s115 = sphi 0, %s113
      %s116 = sphi 0, %s115
      %s130 = sphi 0, %s116
      %s134 = sphi 0, %s134
      %s136 = sphi 0, %s134
      %s137 = sphi 0, %s136
      %s151 = sphi 0, %s137
      %s155 = sphi 0, %s155
      %s157 = sphi 0, %s155
      %s158 = sphi 0, %s157
      %s172 = sphi 0, %s158
      %s178 = sphi 0, %s180
      %s181 = sphi 0, %s178
      %s182 = sphi 0, %s181
      %s198 = sphi 0, %s182
    $region4: #{tpu_custom_call.1} parent=1 // loop_header_branch
      %19 = sbr.rel (%p17) target = $region8
    $region5: #{tpu_custom_call.1} parent=1 // loop_body
      %s21 = ssub.s32 %s16, 1
      %s22 = ssub.s32 %s16, 2
      %s23 = sadd.s32 %s16, 1
      %s24 = ssub.s32 %s16, %s23
      %p25 = scmp.eq.s32.totalorder %s24, 0
      %s27 = sadd.s32 %s26, 1
      %s28 = scalar_select %p25, %s26, %s27
      %p31 = pneg %p25
      %p32 = scmp.eq.s32.totalorder %s16, 1
      %p33 = por %p31, %p32
      %p34 = scmp.ne.s32.totalorder %s26, %s29
      %p35 = scmp.eq.s32.totalorder %s16, 0
      %p36 = por %p34, %p35
      %p37 = scmp.ne.s32.totalorder %s26, %s29
      %p38 = scmp.eq.s32.totalorder %s21, 1
      %p39 = por %p37, %p38
      %p40 = scmp.ne.s32.totalorder %s29, %s30
      %p41 = scmp.eq.s32.totalorder %s21, 0
      %p42 = por %p40, %p41
      %p43 = scmp.ne.s32.totalorder %s29, %s30
      %p44 = scmp.eq.s32.totalorder %s22, 1
      %p45 = por %p43, %p44
      %p47 = scmp.ne.s32.totalorder %s30, %s46
      %p48 = scmp.eq.s32.totalorder %s22, 0
      %p49 = por %p47, %p48
      %s51 = sadd.s32 %s50, 1
      %p54 = scmp.eq.s32.totalorder %s16, 1
      %p55 = scmp.ne.s32.totalorder %s50, %s52
      %p56 = scmp.eq.s32.totalorder %s16, 0
      %p57 = por %p55, %p56
      %p58 = scmp.ne.s32.totalorder %s50, %s52
      %p59 = scmp.eq.s32.totalorder %s21, 1
      %p60 = por %p58, %p59
      %p61 = scmp.ne.s32.totalorder %s52, %s53
      %p62 = scmp.eq.s32.totalorder %s21, 0
      %p63 = por %p61, %p62
      %p64 = scmp.ne.s32.totalorder %s52, %s53
      %p65 = scmp.eq.s32.totalorder %s22, 1
      %p66 = por %p64, %p65
      %p68 = scmp.ne.s32.totalorder %s53, %s67
      %p69 = scmp.eq.s32.totalorder %s22, 0
      %p70 = por %p68, %p69
      %s72 = sadd.s32 %s71, 1
      %p75 = scmp.eq.s32.totalorder %s16, 1
      %p76 = scmp.ne.s32.totalorder %s71, %s73
      %p77 = scmp.eq.s32.totalorder %s16, 0
      %p78 = por %p76, %p77
      %p79 = scmp.ne.s32.totalorder %s71, %s73
      %p80 = scmp.eq.s32.totalorder %s21, 1
      %p81 = por %p79, %p80
      %p82 = scmp.ne.s32.totalorder %s73, %s74
      %p83 = scmp.eq.s32.totalorder %s21, 0
      %p84 = por %p82, %p83
      %p85 = scmp.ne.s32.totalorder %s73, %s74
      %p86 = scmp.eq.s32.totalorder %s22, 1
      %p87 = por %p85, %p86
      %p89 = scmp.ne.s32.totalorder %s74, %s88
      %p90 = scmp.eq.s32.totalorder %s22, 0
      %p91 = por %p89, %p90
      %s93 = sadd.s32 %s92, 1
      %p96 = scmp.eq.s32.totalorder %s16, 1
      %p97 = scmp.ne.s32.totalorder %s92, %s94
      %p98 = scmp.eq.s32.totalorder %s16, 0
      %p99 = por %p97, %p98
      %p100 = scmp.ne.s32.totalorder %s92, %s94
      %p101 = scmp.eq.s32.totalorder %s21, 1
      %p102 = por %p100, %p101
      %p103 = scmp.ne.s32.totalorder %s94, %s95
      %p104 = scmp.eq.s32.totalorder %s21, 0
      %p105 = por %p103, %p104
      %p106 = scmp.ne.s32.totalorder %s94, %s95
      %p107 = scmp.eq.s32.totalorder %s22, 1
      %p108 = por %p106, %p107
      %p110 = scmp.ne.s32.totalorder %s95, %s109
      %p111 = scmp.eq.s32.totalorder %s22, 0
      %p112 = por %p110, %p111
      %s114 = sadd.s32 %s113, 1
      %p117 = scmp.eq.s32.totalorder %s16, 1
      %p118 = scmp.ne.s32.totalorder %s113, %s115
      %p119 = scmp.eq.s32.totalorder %s16, 0
      %p120 = por %p118, %p119
      %p121 = scmp.ne.s32.totalorder %s113, %s115
      %p122 = scmp.eq.s32.totalorder %s21, 1
      %p123 = por %p121, %p122
      %p124 = scmp.ne.s32.totalorder %s115, %s116
      %p125 = scmp.eq.s32.totalorder %s21, 0
      %p126 = por %p124, %p125
      %p127 = scmp.ne.s32.totalorder %s115, %s116
      %p128 = scmp.eq.s32.totalorder %s22, 1
      %p129 = por %p127, %p128
      %p131 = scmp.ne.s32.totalorder %s116, %s130
      %p132 = scmp.eq.s32.totalorder %s22, 0
      %p133 = por %p131, %p132
      %s135 = sadd.s32 %s134, 1
      %p138 = scmp.eq.s32.totalorder %s16, 1
      %p139 = scmp.ne.s32.totalorder %s134, %s136
      %p140 = scmp.eq.s32.totalorder %s16, 0
      %p141 = por %p139, %p140
      %p142 = scmp.ne.s32.totalorder %s134, %s136
      %p143 = scmp.eq.s32.totalorder %s21, 1
      %p144 = por %p142, %p143
      %p145 = scmp.ne.s32.totalorder %s136, %s137
      %p146 = scmp.eq.s32.totalorder %s21, 0
      %p147 = por %p145, %p146
      %p148 = scmp.ne.s32.totalorder %s136, %s137
      %p149 = scmp.eq.s32.totalorder %s22, 1
      %p150 = por %p148, %p149
      %p152 = scmp.ne.s32.totalorder %s137, %s151
      %p153 = scmp.eq.s32.totalorder %s22, 0
      %p154 = por %p152, %p153
      %s156 = sadd.s32 %s155, 1
      %p159 = scmp.eq.s32.totalorder %s16, 1
      %p160 = scmp.ne.s32.totalorder %s155, %s157
      %p161 = scmp.eq.s32.totalorder %s16, 0
      %p162 = por %p160, %p161
      %p163 = scmp.ne.s32.totalorder %s155, %s157
      %p164 = scmp.eq.s32.totalorder %s21, 1
      %p165 = por %p163, %p164
      %p166 = scmp.ne.s32.totalorder %s157, %s158
      %p167 = scmp.eq.s32.totalorder %s21, 0
      %p168 = por %p166, %p167
      %p169 = scmp.ne.s32.totalorder %s157, %s158
      %p170 = scmp.eq.s32.totalorder %s22, 1
      %p171 = por %p169, %p170
      %p173 = scmp.ne.s32.totalorder %s158, %s172
      %p174 = scmp.eq.s32.totalorder %s22, 0
      %p175 = por %p173, %p174
      %s176 = ssub.s32 %s16, %s23
      %p177 = scmp.eq.s32.totalorder %s176, 0
      %s179 = sadd.s32 %s178, 1
      %s180 = scalar_select %p177, %s178, %s179
      %p183 = pneg %p177
      %p184 = scmp.eq.s32.totalorder %s16, 1
      %p185 = por %p183, %p184
      %p186 = scmp.ne.s32.totalorder %s178, %s181
      %p187 = scmp.eq.s32.totalorder %s16, 0
      %p188 = por %p186, %p187
      %p189 = scmp.ne.s32.totalorder %s178, %s181
      %p190 = scmp.eq.s32.totalorder %s21, 1
      %p191 = por %p189, %p190
      %p192 = scmp.ne.s32.totalorder %s181, %s182
      %p193 = scmp.eq.s32.totalorder %s21, 0
      %p194 = por %p192, %p193
      %p195 = scmp.ne.s32.totalorder %s181, %s182
      %p196 = scmp.eq.s32.totalorder %s22, 1
      %p197 = por %p195, %p196
      %p199 = scmp.ne.s32.totalorder %s182, %s198
      %p200 = scmp.eq.s32.totalorder %s22, 0
      %p201 = por %p199, %p200
      %p202 = scmp.le.s32.totalorder 1, %s16
      %p203 = scmp.lt.s32.totalorder %s16, 3
      %p204 = pnand %p202, %p203
      %p205 = pneg %p204
      // Predicated region
      $region9: #{tpu_custom_call.1} parent=5 // pred_check
        _
      $region10: #{tpu_custom_call.1} parent=5 // pred_check_branch
        %207 = sbr.rel (%p204) target = $region12
      $region11: #{tpu_custom_call.1} parent=5 // pred_region
        %s208 = ssub.s32 %s16, 1
        // Predicated region
        $region13: #{tpu_custom_call.1} parent=11 // pred_check
          %p209 = pneg %p63
        $region14: #{tpu_custom_call.1} parent=11 // pred_check_branch
          %211 = sbr.rel (%p209) target = $region16
        $region15: #{tpu_custom_call.1} parent=11 // pred_region
          _
        $region16: #{tpu_custom_call.1} parent=11 // pred_fallthru
          _
        // Predicated region
        $region17: #{tpu_custom_call.1} parent=11 // pred_check
          %p212 = pneg %p84
        $region18: #{tpu_custom_call.1} parent=11 // pred_check_branch
          %214 = sbr.rel (%p212) target = $region20
        $region19: #{tpu_custom_call.1} parent=11 // pred_region
          _
        $region20: #{tpu_custom_call.1} parent=11 // pred_fallthru
          _
        // Predicated region
        $region21: #{tpu_custom_call.1} parent=11 // pred_check
          %p215 = pneg %p105
        $region22: #{tpu_custom_call.1} parent=11 // pred_check_branch
          %217 = sbr.rel (%p215) target = $region24
        $region23: #{tpu_custom_call.1} parent=11 // pred_region
          _
        $region24: #{tpu_custom_call.1} parent=11 // pred_fallthru
          _
        // Predicated region
        $region25: #{tpu_custom_call.1} parent=11 // pred_check
          %p218 = pneg %p126
        $region26: #{tpu_custom_call.1} parent=11 // pred_check_branch
          %220 = sbr.rel (%p218) target = $region28
        $region27: #{tpu_custom_call.1} parent=11 // pred_region
          _
        $region28: #{tpu_custom_call.1} parent=11 // pred_fallthru
          _
        // Predicated region
        $region29: #{tpu_custom_call.1} parent=11 // pred_check
          %p221 = pneg %p147
        $region30: #{tpu_custom_call.1} parent=11 // pred_check_branch
          %223 = sbr.rel (%p221) target = $region32
        $region31: #{tpu_custom_call.1} parent=11 // pred_region
          _
        $region32: #{tpu_custom_call.1} parent=11 // pred_fallthru
          _
        // Predicated region
        $region33: #{tpu_custom_call.1} parent=11 // pred_check
          %p224 = pneg %p168
        $region34: #{tpu_custom_call.1} parent=11 // pred_check_branch
          %226 = sbr.rel (%p224) target = $region36
        $region35: #{tpu_custom_call.1} parent=11 // pred_region
          _
        $region36: #{tpu_custom_call.1} parent=11 // pred_fallthru
          _
      $region12: #{tpu_custom_call.1} parent=5 // pred_fallthru
        _
      %p227 = scmp.lt.s32.totalorder %s16, 2
      // Predicated region
      $region37: #{tpu_custom_call.1} parent=5 // pred_check
        %p228 = pneg %p227
      $region38: #{tpu_custom_call.1} parent=5 // pred_check_branch
        %230 = sbr.rel (%p228) target = $region40
      $region39: #{tpu_custom_call.1} parent=5 // pred_region
        // Predicated region
        $region41: #{tpu_custom_call.1} parent=39 // pred_check
          %p231 = pneg %p36
        $region42: #{tpu_custom_call.1} parent=39 // pred_check_branch
          %233 = sbr.rel (%p231) target = $region44
        $region43: #{tpu_custom_call.1} parent=39 // pred_region
          %p234 = scmp.lt.s32.totalorder %s16, 1
          %s235 = scalar_select %p234, %s16, 1
          %s236 = smul.addr %s235, 8
          %s237 = scalar_lea.vmem %s0, %s236
        $region44: #{tpu_custom_call.1} parent=39 // pred_fallthru
          _
      $region40: #{tpu_custom_call.1} parent=5 // pred_fallthru
        _
      %p238 = scmp.le.s32.totalorder 1, %s16
      %p239 = scmp.lt.s32.totalorder %s16, 3
      %p240 = pnand %p238, %p239
      %p241 = pneg %p240
      // Predicated region
      $region45: #{tpu_custom_call.1} parent=5 // pred_check
        _
      $region46: #{tpu_custom_call.1} parent=5 // pred_check_branch
        %243 = sbr.rel (%p240) target = $region48
      $region47: #{tpu_custom_call.1} parent=5 // pred_region
        %s244 = ssub.s32 %s16, 1
        %p245 = scmp.lt.s32.totalorder %s21, 1
        %s246 = scalar_select %p245, %s21, 1
        %s247 = smul.addr %s246, 8
        %s248 = scalar_lea.vmem %s0, %s247
        %p249 = pneg %p42
        %p250 = pneg %p39
        %p251 = pneg %p63
        %p252 = pneg %p60
        %p253 = pneg %p84
        %p254 = pneg %p81
        %p255 = pneg %p105
        %p256 = pneg %p102
        %p257 = pneg %p126
        %p258 = pneg %p123
        %p259 = pneg %p147
        %p260 = pneg %p144
        %p261 = pneg %p168
        %p262 = pneg %p165
        %p263 = pneg %p194
        %p264 = pneg %p191
        %s265 = sand.u32 %s181, 1
        %s266 = scalar_lea.sflag [#allocation3], %s265
        %s267 = sand.u32 %s181, 1
        %s268 = smul.addr %s267, 8
        %s269 = scalar_lea.vmem [#allocation2], %s268
        %p270 = scmp.lt.s32.totalorder %s21, 1
        %s271 = scalar_select %p270, %s21, 1
        %s272 = smul.addr %s271, 8
        %s273 = scalar_lea.vmem %s0, %s272
        %v275 = vld [vmem:[%s273] sm:$0xff]
        %vm276 = vcmask 261120
        %v277 = vsel %vm276, %v275, 0.0
        %278 = vadd.xlane.f32.xlu0 %v277
        %v279 = vpop.xlane.xlu0 %278
        %v280 = vrcp.pop 32.0
        %v281 = vmul.f32 %v279, %v280
        %v282 = vsub.f32 %v275, %v281
        %v283 = vmul.f32 %v282, %v282
        %v284 = vsel %vm276, %v283, 0.0
        %285 = vadd.xlane.f32.xlu0 %v284
        %v286 = vpop.xlane.xlu0 %285
        %v287 = vmul.f32 %v286, %v280
        %v288 = vadd.f32 %v287, 1e-05
        %v289 = vrsqrt.pop %v288
        %v290 = vmul.f32 %v282, %v289
        %v291 = vld [vmem:[%s1] sm:$0x1]
        %v293 = vlaneseq
        %v294 = vshrl.u32 %v293, 7
        %v295 = vsub.s32 0, %v294
        %v296 = vrot.slane %v291, %v295
        %v298 = vmul.f32 %v290, %v296
        %v299 = vld [vmem:[%s2] sm:$0x1]
        %v301 = vlaneseq
        %v302 = vshrl.u32 %v301, 7
        %v303 = vsub.s32 0, %v302
        %v304 = vrot.slane %v299, %v303
        %v306 = vadd.f32 %v298, %v304
        %v307 = vpack.c.bf16 %v306, %v306
        %v308 = vld [vmem:[%s3] sm:$0xf]
        %v309 = vld [vmem:[%s3 + $0x4] sm:$0xf]
        %v310 = vld [vmem:[%s3 + $0x8] sm:$0xf]
        %v311 = vld [vmem:[%s3 + $0xc] sm:$0xf]
        %v312 = vld [vmem:[%s4] sm:$0x1]
        %v314 = vlaneseq
        %v315 = vshrl.u32 %v314, 7
        %v316 = vsub.s32 0, %v315
        %v317 = vrot.slane %v312, %v316
        %v323 = vunpack.c.l.b16 %v308
        %v324 = vunpack.c.l.b16 %v309
        %v325 = vunpack.c.l.b16 %v310
        %v326 = vunpack.c.l.b16 %v311
        %v327 = vpack.c.b16 %v324, %v323
        %v328 = vpack.c.b16 %v326, %v325
        %v332 = vsel %vm276, %v307, 0
        %334 = vmatprep.subr.bf16.mxu0 0
        %335 = vmatpush1.bf16.msra.mxu0 0
        %336 = vmatprep.subr.bf16.mxu0 0
        %337 = vmatpush1.bf16.msra.mxu0 0
        %338 = vmatprep.subr.bf16.mxu0 0
        %339 = vmatpush1.bf16.msra.mxu0 0
        %340 = vmatprep.subr.bf16.mxu0 0
        %341 = vmatpush1.bf16.msra.mxu0 0
        %342 = vmatprep.subr.bf16.mxu0 0
        %343 = vmatpush1.bf16.msra.mxu0 0
        %344 = vmatprep.subr.bf16.mxu0 0
        %345 = vmatpush1.bf16.msra.mxu0 0
        %346 = vmatprep.subr.bf16.mxu0 0
        %347 = vmatpush1.bf16.msra.mxu0 %v328
        %348 = vmatprep.subr.bf16.mxu0 0
        %349 = vmatpush1.bf16.msra.mxu0 %v327
        %350 = vmatprep.subr.bf16.mxu0 0
        %351 = vmatpush2.bf16.msra.mxu0 0
        %352 = vmatprep.subr.bf16.mxu0 0
        %353 = vmatpush2.bf16.msra.mxu0 0
        %354 = vmatprep.subr.bf16.mxu0 0
        %355 = vmatpush2.bf16.msra.mxu0 0
        %356 = vmatprep.subr.bf16.mxu0 0
        %357 = vmatpush2.bf16.msra.mxu0 0
        %358 = vmatprep.subr.bf16.mxu0 0
        %359 = vmatpush2.bf16.msra.mxu0 0
        %360 = vmatprep.subr.bf16.mxu0 0
        %361 = vmatpush2.bf16.msra.mxu0 0
        %362 = vmatprep.subr.bf16.mxu0 0
        %363 = vmatpush2.bf16.msra.mxu0 0
        %364 = vmatprep.subr.bf16.mxu0 0
        %365 = vmatpush2.bf16.msra.mxu0 0
        %366 = vmatprep.mubr.bf16.mxu0 0
        %367 = vmatmul.mubr.bf16.gmra.mxu0 %v332
        %v368 = vpop.f32.mrf.mxu0
        %v369 = vadd.f32 %v317, %v368
        %v370 = vpop.f32.mrf.mxu0
        %v371 = vpop.f32.mrf.mxu0
        %v372 = vpop.f32.mrf.mxu0
        %373 = vdwg.mxu0
        %v374 = vmul.f32 %v369, 0.5
        %v375 = vmul.f32 %v369, 0.70710677
        %v376 = verf.f32.pop %v375
        %v377 = vadd.f32 %v376, 1.0
        %v378 = vmul.f32 %v374, %v377
        %v379 = vpack.c.bf16 %v378, %v378
        %v380 = vld [vmem:[%s5] sm:$0xf]
        %v381 = vld [vmem:[%s5 + $0x4] sm:$0xf]
        %v382 = vld [vmem:[%s5 + $0x8] sm:$0xf]
        %v383 = vld [vmem:[%s5 + $0xc] sm:$0xf]
        %v384 = vld [vmem:[%s5 + $0x10] sm:$0xf]
        %v385 = vld [vmem:[%s5 + $0x14] sm:$0xf]
        %v386 = vld [vmem:[%s5 + $0x18] sm:$0xf]
        %v387 = vld [vmem:[%s5 + $0x1c] sm:$0xf]
        %v388 = vld [vmem:[%s6] sm:$0x1]
        %v390 = vlaneseq
        %v391 = vshrl.u32 %v390, 7
        %v392 = vsub.s32 0, %v391
        %v393 = vrot.slane %v388, %v392
        %v403 = vunpack.c.l.b16 %v380
        %v404 = vunpack.c.l.b16 %v381
        %v405 = vunpack.c.l.b16 %v382
        %v406 = vunpack.c.l.b16 %v383
        %v407 = vunpack.c.l.b16 %v384
        %v408 = vunpack.c.l.b16 %v385
        %v409 = vunpack.c.l.b16 %v386
        %v410 = vunpack.c.l.b16 %v387
        %v411 = vpack.c.b16 %v404, %v403
        %v412 = vpack.c.b16 %v406, %v405
        %v413 = vpack.c.b16 %v408, %v407
        %v414 = vpack.c.b16 %v410, %v409
        %vm419 = vcmask 523264
        %v421 = vsel %vm419, %v379, 0
        %423 = vmatprep.subr.bf16.mxu0 0
        %424 = vmatpush1.bf16.msra.mxu0 0
        %425 = vmatprep.subr.bf16.mxu0 0
        %426 = vmatpush1.bf16.msra.mxu0 0
        %427 = vmatprep.subr.bf16.mxu0 0
        %428 = vmatpush1.bf16.msra.mxu0 0
        %429 = vmatprep.subr.bf16.mxu0 0
        %430 = vmatpush1.bf16.msra.mxu0 0
        %431 = vmatprep.subr.bf16.mxu0 0
        %432 = vmatpush1.bf16.msra.mxu0 %v414
        %433 = vmatprep.subr.bf16.mxu0 0
        %434 = vmatpush1.bf16.msra.mxu0 %v413
        %435 = vmatprep.subr.bf16.mxu0 0
        %436 = vmatpush1.bf16.msra.mxu0 %v412
        %437 = vmatprep.subr.bf16.mxu0 0
        %438 = vmatpush1.bf16.msra.mxu0 %v411
        %439 = vmatprep.subr.bf16.mxu0 0
        %440 = vmatpush2.bf16.msra.mxu0 0
        %441 = vmatprep.subr.bf16.mxu0 0
        %442 = vmatpush2.bf16.msra.mxu0 0
        %443 = vmatprep.subr.bf16.mxu0 0
        %444 = vmatpush2.bf16.msra.mxu0 0
        %445 = vmatprep.subr.bf16.mxu0 0
        %446 = vmatpush2.bf16.msra.mxu0 0
        %447 = vmatprep.subr.bf16.mxu0 0
        %448 = vmatpush2.bf16.msra.mxu0 0
        %449 = vmatprep.subr.bf16.mxu0 0
        %450 = vmatpush2.bf16.msra.mxu0 0
        %451 = vmatprep.subr.bf16.mxu0 0
        %452 = vmatpush2.bf16.msra.mxu0 0
        %453 = vmatprep.subr.bf16.mxu0 0
        %454 = vmatpush2.bf16.msra.mxu0 0
        %455 = vmatprep.mubr.bf16.mxu0 0
        %456 = vmatmul.mubr.bf16.gmra.mxu0 %v421
        %v457 = vpop.f32.mrf.mxu0
        %v458 = vadd.f32 %v393, %v457
        %v459 = vpop.f32.mrf.mxu0
        %v460 = vpop.f32.mrf.mxu0
        %v461 = vpop.f32.mrf.mxu0
        %462 = vdwg.mxu0
        %463 = vst.msk [vmem:[%s269] sm:$0xff] %vm276, %v458
        %s464 = sand.u32 %s181, 1
        %s465 = scalar_lea.sflag [#allocation3], %s464
        %s466 = sand.u32 %s181, 1
        %s467 = smul.addr %s466, 8
        %s468 = scalar_lea.vmem [#allocation2], %s467
        // Predicated region
        $region49: #{tpu_custom_call.1} parent=47 // pred_check
          %p469 = pneg %p191
        $region50: #{tpu_custom_call.1} parent=47 // pred_check_branch
          %471 = sbr.rel (%p469) target = $region52
        $region51: #{tpu_custom_call.1} parent=47 // pred_region
          %s473 = ssub.s32 128, 128
          %474 = vsyncadd %s465, %s473
          %s475 = smul.addr %s21, 128
          %s476 = scalar_lea.hbm %s7, %s475
          %s478 = sshll.u32 %s468, 4
          %s479 = int_to_ptr.vmem [resolvable:$true] %s478
          %481 = dma.vmem_to_hbm [thread:$0]  %s479, 128, %s476, %s465
        $region52: #{tpu_custom_call.1} parent=47 // pred_fallthru
          _
      $region48: #{tpu_custom_call.1} parent=5 // pred_fallthru
        _
      %p482 = scmp.le.s32.totalorder 2, %s16
      // Predicated region
      $region53: #{tpu_custom_call.1} parent=5 // pred_check
        %p483 = pneg %p482
      $region54: #{tpu_custom_call.1} parent=5 // pred_check_branch
        %485 = sbr.rel (%p483) target = $region56
      $region55: #{tpu_custom_call.1} parent=5 // pred_region
        %s486 = ssub.s32 %s16, 2
        // Predicated region
        $region57: #{tpu_custom_call.1} parent=55 // pred_check
          %p487 = pneg %p197
        $region58: #{tpu_custom_call.1} parent=55 // pred_check_branch
          %489 = sbr.rel (%p487) target = $region60
        $region59: #{tpu_custom_call.1} parent=55 // pred_region
          %s490 = sand.u32 %s182, 1
          %s491 = scalar_lea.sflag [#allocation3], %s490
          %s492 = sand.u32 %s182, 1
          %s493 = smul.addr %s492, 8
          %s494 = scalar_lea.vmem [#allocation2], %s493
          %495 = dma.done %s491, 128
        $region60: #{tpu_custom_call.1} parent=55 // pred_fallthru
          _
      $region56: #{tpu_custom_call.1} parent=5 // pred_fallthru
        _
    $region6: #{tpu_custom_call.1} parent=1 // loop_footer
      %s20 = sadd.s32 1, %s16
    $region7: #{tpu_custom_call.1} parent=1 // loop_footer_branch
      %15 = sbr.rel target = $region3
    $region8: #{tpu_custom_call.1} parent=1 // loop_exit
      _
    %496 = vsyncpa [#allocation3], 1
    %s497 = scalar_lea.sflag [#allocation3], 1
    %498 = vsyncpa %s497, 1

</llo_original>
